<compile_context>
chip_gen: v6e
topology: v6e:2x2x1
jax: 0.10.0
libtpu: 0.0.40
codegen_flags: <defaults>
</compile_context>

<pallas_src>
import jax
import jax.numpy as jnp
from jax.experimental import pallas as pl
from jax.experimental.pallas import tpu as pltpu


def _round_up(x: int, m: int) -> int:
    return ((x + m - 1) // m) * m


def _copy_kernel(x_ref, o_ref):
    o_ref[...] = x_ref[...]


def pallas_identity_copy(x2d: jnp.ndarray,
                         row_block: int = 256,
                         col_block: int = 1024) -> jnp.ndarray:
    """Tiled, pipelined Pallas pass-through copy of a 2-D array.

    Demonstration / test kernel only — NOT used in CNNEnsemble.forward.
    """
    rows, cols = x2d.shape

    # Lane-dense / sublane-dense tiling: col block multiple of 128, row block
    # multiple of 8, both clamped to the (padded) array extent.
    col_block = min(col_block, _round_up(cols, 128))
    row_block = min(row_block, _round_up(rows, 8))
    cols_p = _round_up(cols, col_block)
    rows_p = _round_up(rows, row_block)

    xp = x2d
    if (rows_p, cols_p) != (rows, cols):
        xp = jnp.pad(x2d, ((0, rows_p - rows), (0, cols_p - cols)))

    grid = (rows_p // row_block, cols_p // col_block)

    out = pl.pallas_call(
        _copy_kernel,
        out_shape=jax.ShapeDtypeStruct((rows_p, cols_p), x2d.dtype),
        grid=grid,
        in_specs=[pl.BlockSpec((row_block, col_block), lambda i, j: (i, j))],
        out_specs=pl.BlockSpec((row_block, col_block), lambda i, j: (i, j)),
        compiler_params=pltpu.CompilerParams(
            dimension_semantics=("parallel", "parallel"),
        ),
    )(xp)

    if (rows_p, cols_p) != (rows, cols):
        out = out[:rows, :cols]
    return out


class CNNEnsemble:
    """JAX/Pallas port of the (empty) PyTorch CNNEnsemble module."""

    def __init__(self, in_C: int = 13):
        # PyTorch __init__ defines no parameters/layers; nothing to initialize.
        self.in_C = in_C

    def forward(self, x: jnp.ndarray):
        # TODO(synk): reference forward is `pass` (returns None); there is no
        # compute to port, so the forward path issues NO device work at all
        # (no identity kernel, no host sync) per the performance review.
        return None

    __call__ = forward


def cnn_ensemble_forward(x: jnp.ndarray):
    return CNNEnsemble(in_C=x.shape[1])(x)


if __name__ == "__main__":
    key = jax.random.PRNGKey(0)
    # NCHW, in_C=13 per the module signature, small spatial dims.
    x = jax.random.normal(key, (2, 13, 16, 16), dtype=jnp.float32)

    # Forward semantics: exactly `pass` -> None, zero device work.
    out = cnn_ensemble_forward(x)
    assert out is None, "CNNEnsemble.forward must return None (body is `pass`)"

    # Standalone Pallas kernel demo/self-test (not part of the forward path):
    # flatten lane-dense: 2*13*16*16 = 6656 = 13 * 512 (512 is a multiple of
    # 128); rows pad 13 -> 16, row_block=8 exercises a real 2-step grid.
    x2d = x.reshape(13, 512)
    y2d = jax.block_until_ready(pallas_identity_copy(x2d, row_block=8))
    assert y2d.shape == x2d.shape
    assert jnp.array_equal(y2d, x2d)

    print("KERNEL_OK")
</pallas_src>

<mosaic_0001>
module attributes {stable_mosaic.version = 11 : i64} {
  func.func @_copy_kernel(%arg0: i32, %arg1: i32, %arg2: memref<8x512xf32, #tpu.memory_space<vmem>>, %arg3: memref<8x512xf32, #tpu.memory_space<vmem>>) attributes {dimension_semantics = [#tpu.dimension_semantics<parallel>, #tpu.dimension_semantics<parallel>], iteration_bounds = array<i64: 2, 1>, scalar_prefetch = 0 : i64, scratch_operands = 0 : i64, tpu.core_type = #tpu.core_type<tc>, window_params = [{transform_indices = @transform_0, window_bounds = array<i64: 8, 512>}, {transform_indices = @transform_1, window_bounds = array<i64: 8, 512>}]} {
    %c0 = arith.constant 0 : index
    %c0_0 = arith.constant 0 : index
    %0 = vector.load %arg2[%c0, %c0_0] : memref<8x512xf32, #tpu.memory_space<vmem>>, vector<8x512xf32>
    %c0_1 = arith.constant 0 : index
    %c0_2 = arith.constant 0 : index
    %1 = vector.load %arg3[%c0_1, %c0_2] : memref<8x512xf32, #tpu.memory_space<vmem>>, vector<8x512xf32>
    tpu.vector_store %arg3[%c0_1, %c0_2], %0 {strides = array<i32>} : memref<8x512xf32, #tpu.memory_space<vmem>>, vector<8x512xf32>,
    return
  }
  func.func @transform_0(%arg0: i32, %arg1: i32) -> (i32, i32) {
    %c0_i32 = arith.constant 0 : i32
    return %arg0, %arg1 : i32, i32
  }
  func.func @transform_1(%arg0: i32, %arg1: i32) -> (i32, i32) {
    %c0_i32 = arith.constant 0 : i32
    return %arg0, %arg1 : i32, i32
  }
}

</mosaic_0001>

<llo_original>
// kernel: tpu_custom_call.1
$region0: #{tpu_custom_call.1}
  #allocation0 [shape = 'u32[]', space=smem, size = 0x4, offset = 0x4, fixed_abs, tag = 'smem constant byte address 0x4 - core index']
  #allocation1 [shape = 'u32[144,128]{1,0:T(1,128)}', space=vmem, size = 0x12000, scoped, tag = 'internal scratch']
  %s0 = inlined_call_operand.hbm [shape: f32[16,512], index: 0, kind: input, shape index: {}]
  %s1 = inlined_call_operand.hbm [shape: f32[16,512], index: 1, kind: output, shape index: {}]
  %s2 = sld [smem:[#allocation0]]
  $region41: #{tpu_custom_call.1} parent=0
    _
  %s4 = ssub.s32 1, %s2
  %s5 = scalar_select 0, %s4, %s2
  $region1: #{tpu_custom_call.1} parent=0
    #allocation2 [shape = 'u8[32768]{0}', space=vmem, size = 0x8000, scoped, tag = 'input window, operand 0']
    #allocation3 [shape = 's32[2]{0}', space=sflag, size = 0x8, scoped, tag = 'scoped memory for tpu_custom_call.1']
    #allocation4 [shape = 's32[2]{0}', space=sflag, size = 0x8, scoped, tag = 'scoped memory for tpu_custom_call.1']
    #allocation5 [shape = 'u8[32768]{0}', space=vmem, size = 0x8000, scoped, tag = 'output window, operand 0']
    %6 = vsyncpa [#allocation3], 0
    %s7 = scalar_lea.sflag [#allocation3], 1
    %8 = vsyncpa %s7, 0
    %9 = vsyncpa [#allocation4], 0
    %s10 = scalar_lea.sflag [#allocation4], 1
    %11 = vsyncpa %s10, 0
    loop: start=0, step=1, limit=4
    $region2: #{tpu_custom_call.1} parent=1 // loop_pre_header
      _
    $region3: #{tpu_custom_call.1} parent=1 // loop_header
      %s13 = sphi 0, %s17
      %p14 = scmp.ge.s32.totalorder %s13, 4
      %s20 = sphi 0, %s32
      %s21 = sphi 0, %s28
      %s22 = sphi 0, %s20
      %s23 = sphi 0, %s21
      %s24 = sphi 0, %s22
      %s25 = sphi 0, %s23
      %s37 = sphi 0, %s39
      %s40 = sphi 0, %s37
      %s41 = sphi 0, %s40
      %s57 = sphi 0, %s41
      %s65 = sphi 0, %s67
      %s68 = sphi 0, %s65
      %s69 = sphi 0, %s68
      %s85 = sphi 0, %s69
    $region4: #{tpu_custom_call.1} parent=1 // loop_header_branch
      %16 = sbr.rel (%p14) target = $region8
    $region5: #{tpu_custom_call.1} parent=1 // loop_body
      %s18 = ssub.s32 %s13, 1
      %s19 = ssub.s32 %s13, 2
      %s26 = sadd.s32 1, %s21
      %p27 = scmp.ge.s32.totalorder %s26, 1
      %s28 = scalar_select %p27, 0, %s26
      %s29 = sadd.s32 1, %s20
      %s30 = scalar_select %p27, %s29, %s20
      %p31 = scmp.ge.s32.totalorder %s30, 2
      %s32 = scalar_select %p31, 0, %s30
      %s33 = ssub.s32 %s20, %s32
      %s34 = ssub.s32 %s21, %s28
      %s35 = sor.u32 %s33, %s34
      %p36 = scmp.eq.s32.totalorder %s35, 0
      %s38 = sadd.s32 %s37, 1
      %s39 = scalar_select %p36, %s37, %s38
      %p42 = pneg %p36
      %p43 = scmp.eq.s32.totalorder %s13, 1
      %p44 = por %p42, %p43
      %p45 = scmp.ne.s32.totalorder %s37, %s40
      %p46 = scmp.eq.s32.totalorder %s13, 0
      %p47 = por %p45, %p46
      %p48 = scmp.ne.s32.totalorder %s37, %s40
      %p49 = scmp.eq.s32.totalorder %s18, 1
      %p50 = por %p48, %p49
      %p51 = scmp.ne.s32.totalorder %s40, %s41
      %p52 = scmp.eq.s32.totalorder %s18, 0
      %p53 = por %p51, %p52
      %p54 = scmp.ne.s32.totalorder %s40, %s41
      %p55 = scmp.eq.s32.totalorder %s19, 1
      %p56 = por %p54, %p55
      %p58 = scmp.ne.s32.totalorder %s41, %s57
      %p59 = scmp.eq.s32.totalorder %s19, 0
      %p60 = por %p58, %p59
      %s61 = ssub.s32 %s20, %s32
      %s62 = ssub.s32 %s21, %s28
      %s63 = sor.u32 %s61, %s62
      %p64 = scmp.eq.s32.totalorder %s63, 0
      %s66 = sadd.s32 %s65, 1
      %s67 = scalar_select %p64, %s65, %s66
      %p70 = pneg %p64
      %p71 = scmp.eq.s32.totalorder %s13, 1
      %p72 = por %p70, %p71
      %p73 = scmp.ne.s32.totalorder %s65, %s68
      %p74 = scmp.eq.s32.totalorder %s13, 0
      %p75 = por %p73, %p74
      %p76 = scmp.ne.s32.totalorder %s65, %s68
      %p77 = scmp.eq.s32.totalorder %s18, 1
      %p78 = por %p76, %p77
      %p79 = scmp.ne.s32.totalorder %s68, %s69
      %p80 = scmp.eq.s32.totalorder %s18, 0
      %p81 = por %p79, %p80
      %p82 = scmp.ne.s32.totalorder %s68, %s69
      %p83 = scmp.eq.s32.totalorder %s19, 1
      %p84 = por %p82, %p83
      %p86 = scmp.ne.s32.totalorder %s69, %s85
      %p87 = scmp.eq.s32.totalorder %s19, 0
      %p88 = por %p86, %p87
      %p89 = scmp.le.s32.totalorder 1, %s13
      %p90 = scmp.lt.s32.totalorder %s13, 3
      %p91 = pnand %p89, %p90
      %p92 = pneg %p91
      // Predicated region
      $region9: #{tpu_custom_call.1} parent=5 // pred_check
        _
      $region10: #{tpu_custom_call.1} parent=5 // pred_check_branch
        %94 = sbr.rel (%p91) target = $region12
      $region11: #{tpu_custom_call.1} parent=5 // pred_region
        %s95 = ssub.s32 %s13, 1
      $region12: #{tpu_custom_call.1} parent=5 // pred_fallthru
        _
      %p96 = scmp.lt.s32.totalorder %s13, 2
      // Predicated region
      $region13: #{tpu_custom_call.1} parent=5 // pred_check
        %p97 = pneg %p96
      $region14: #{tpu_custom_call.1} parent=5 // pred_check_branch
        %99 = sbr.rel (%p97) target = $region16
      $region15: #{tpu_custom_call.1} parent=5 // pred_region
        // Predicated region
        $region17: #{tpu_custom_call.1} parent=15 // pred_check
          %p100 = pneg %p47
        $region18: #{tpu_custom_call.1} parent=15 // pred_check_branch
          %102 = sbr.rel (%p100) target = $region20
        $region19: #{tpu_custom_call.1} parent=15 // pred_region
          %s103 = sand.u32 %s37, 1
          %s104 = scalar_lea.sflag [#allocation3], %s103
          %s105 = sand.u32 %s37, 1
          %s106 = smul.addr %s105, 32
          %s107 = scalar_lea.vmem [#allocation2], %s106
          %s108 = smul.u32 4, %s21
          %s110 = ssub.s32 512, 512
          %111 = vsyncadd %s104, %s110
          %s112 = smul.addr %s20, 4
          %s113 = sadd.s32 %s108, %s112
          %s114 = smul.addr %s113, 128
          %s115 = scalar_lea.hbm %s0, %s114
          %s117 = sshll.u32 %s107, 4
          %s118 = int_to_ptr.vmem [resolvable:$true] %s117
          %120 = dma.hbm_to_vmem [thread:$0]  %s115, 512, %s118, %s104
        $region20: #{tpu_custom_call.1} parent=15 // pred_fallthru
          _
      $region16: #{tpu_custom_call.1} parent=5 // pred_fallthru
        _
      %p121 = scmp.le.s32.totalorder 1, %s13
      %p122 = scmp.lt.s32.totalorder %s13, 3
      %p123 = pnand %p121, %p122
      %p124 = pneg %p123
      // Predicated region
      $region21: #{tpu_custom_call.1} parent=5 // pred_check
        _
      $region22: #{tpu_custom_call.1} parent=5 // pred_check_branch
        %126 = sbr.rel (%p123) target = $region24
      $region23: #{tpu_custom_call.1} parent=5 // pred_region
        %s127 = ssub.s32 %s13, 1
        %s128 = sand.u32 %s40, 1
        %s129 = scalar_lea.sflag [#allocation3], %s128
        %s130 = sand.u32 %s40, 1
        %s131 = smul.addr %s130, 32
        %s132 = scalar_lea.vmem [#allocation2], %s131
        // Predicated region
        $region25: #{tpu_custom_call.1} parent=23 // pred_check
          %p133 = pneg %p53
        $region26: #{tpu_custom_call.1} parent=23 // pred_check_branch
          %135 = sbr.rel (%p133) target = $region28
        $region27: #{tpu_custom_call.1} parent=23 // pred_region
          %136 = dma.done %s129, 512
        $region28: #{tpu_custom_call.1} parent=23 // pred_fallthru
          _
        %s137 = sand.u32 %s40, 1
        %s138 = scalar_lea.sflag [#allocation3], %s137
        %s139 = sand.u32 %s40, 1
        %s140 = smul.addr %s139, 32
        %s141 = scalar_lea.vmem [#allocation2], %s140
        %p142 = pneg %p53
        %p143 = pneg %p50
        %p144 = pneg %p81
        %p145 = pneg %p78
        %s146 = sand.u32 %s68, 1
        %s147 = scalar_lea.sflag [#allocation4], %s146
        %s148 = sand.u32 %s68, 1
        %s149 = smul.addr %s148, 32
        %s150 = scalar_lea.vmem [#allocation5], %s149
        %s151 = smul.u32 4, %s23
        %s152 = smul.u32 4, %s23
        %v153 = vld [vmem:[%s132] sm:$0xff]
        %v154 = vld [vmem:[%s132 + $0x8] sm:$0xff]
        %v155 = vld [vmem:[%s132 + $0x10] sm:$0xff]
        %v156 = vld [vmem:[%s132 + $0x18] sm:$0xff]
        %157 = vst [vmem:[%s150] sm:$0xff] %v153
        %158 = vst [vmem:[%s150 + $0x8] sm:$0xff] %v154
        %159 = vst [vmem:[%s150 + $0x10] sm:$0xff] %v155
        %160 = vst [vmem:[%s150 + $0x18] sm:$0xff] %v156
        %s161 = sand.u32 %s68, 1
        %s162 = scalar_lea.sflag [#allocation4], %s161
        %s163 = sand.u32 %s68, 1
        %s164 = smul.addr %s163, 32
        %s165 = scalar_lea.vmem [#allocation5], %s164
        // Predicated region
        $region29: #{tpu_custom_call.1} parent=23 // pred_check
          %p166 = pneg %p78
        $region30: #{tpu_custom_call.1} parent=23 // pred_check_branch
          %168 = sbr.rel (%p166) target = $region32
        $region31: #{tpu_custom_call.1} parent=23 // pred_region
          %s169 = smul.u32 4, %s23
          %s171 = ssub.s32 512, 512
          %172 = vsyncadd %s162, %s171
          %s173 = smul.addr %s22, 4
          %s174 = sadd.s32 %s169, %s173
          %s175 = smul.addr %s174, 128
          %s176 = scalar_lea.hbm %s1, %s175
          %s178 = sshll.u32 %s165, 4
          %s179 = int_to_ptr.vmem [resolvable:$true] %s178
          %181 = dma.vmem_to_hbm [thread:$0]  %s179, 512, %s176, %s162
        $region32: #{tpu_custom_call.1} parent=23 // pred_fallthru
          _
      $region24: #{tpu_custom_call.1} parent=5 // pred_fallthru
        _
      %p182 = scmp.le.s32.totalorder 2, %s13
      // Predicated region
      $region33: #{tpu_custom_call.1} parent=5 // pred_check
        %p183 = pneg %p182
      $region34: #{tpu_custom_call.1} parent=5 // pred_check_branch
        %185 = sbr.rel (%p183) target = $region36
      $region35: #{tpu_custom_call.1} parent=5 // pred_region
        %s186 = ssub.s32 %s13, 2
        // Predicated region
        $region37: #{tpu_custom_call.1} parent=35 // pred_check
          %p187 = pneg %p84
        $region38: #{tpu_custom_call.1} parent=35 // pred_check_branch
          %189 = sbr.rel (%p187) target = $region40
        $region39: #{tpu_custom_call.1} parent=35 // pred_region
          %s190 = sand.u32 %s69, 1
          %s191 = scalar_lea.sflag [#allocation4], %s190
          %s192 = sand.u32 %s69, 1
          %s193 = smul.addr %s192, 32
          %s194 = scalar_lea.vmem [#allocation5], %s193
          %195 = dma.done %s191, 512
        $region40: #{tpu_custom_call.1} parent=35 // pred_fallthru
          _
      $region36: #{tpu_custom_call.1} parent=5 // pred_fallthru
        _
    $region6: #{tpu_custom_call.1} parent=1 // loop_footer
      %s17 = sadd.s32 1, %s13
    $region7: #{tpu_custom_call.1} parent=1 // loop_footer_branch
      %12 = sbr.rel target = $region3
    $region8: #{tpu_custom_call.1} parent=1 // loop_exit
      _
    %196 = vsyncpa [#allocation3], 1
    %s197 = scalar_lea.sflag [#allocation3], 1
    %198 = vsyncpa %s197, 1
    %199 = vsyncpa [#allocation4], 1
    %s200 = scalar_lea.sflag [#allocation4], 1
    %201 = vsyncpa %s200, 1

</llo_original>
